<compile_context>
chip_gen: v7x
topology: tpu7x:2x2x1
jax: 0.10.0
libtpu: 0.0.40
codegen_flags: <defaults>
</compile_context>

<pallas_src>
import functools

import jax
import jax.numpy as jnp
from jax.experimental import pallas as pl
from jax.experimental.pallas import tpu as pltpu


def _round_up(x: int, m: int) -> int:
    return ((x + m - 1) // m) * m


def rnn_kernel(x_ref, wx_ref, wh_ref, b_ref, out_ref, h_ref, *, t_chunk, b_pad):
    """One grid step = one chunk of T_CHUNK timesteps.

    x_ref   : (T_CHUNK*B_pad, D_in)      chunk inputs, time-major rows
    wx_ref  : (D_in, Dh_pad)             input->hidden weight (transposed, padded)
    wh_ref  : (Dh_pad, Dh_pad)           hidden->hidden weight (transposed, padded)
    b_ref   : (1, Dh_pad)                bias (padded)
    out_ref : (T_CHUNK*B_pad, Dh_pad)    stacked hidden states for this chunk
    h_ref   : (B_pad, Dh_pad)            VMEM scratch; hidden state carried
                                         across grid steps (chunks)
    """
    @pl.when(pl.program_id(0) == 0)
    def _():
        h_ref[...] = jnp.zeros_like(h_ref)

    # Hoisted input projection: ONE MXU matmul for the whole chunk plus the
    # bias add.  The lane-dense output block doubles as the staging buffer for
    # P, so each timestep only adds its precomputed rows.
    out_ref[...] = (
        jnp.dot(x_ref[...], wx_ref[...], preferred_element_type=jnp.float32)
        + b_ref[...]
    )

    wh = wh_ref[...]

    def step(t, h):
        row = pl.multiple_of(t * b_pad, b_pad)  # b_pad is a multiple of 8
        pre = out_ref[pl.ds(row, b_pad), :] + jnp.dot(
            h.astype(wh.dtype), wh, preferred_element_type=jnp.float32
        )
        h_new = jnp.tanh(pre)  # activation kept in f32 (v5e has no bf16 EUP path)
        out_ref[pl.ds(row, b_pad), :] = h_new
        return h_new

    # Only h @ Wh^T remains on the serial critical path; unrolled for LLO
    # scheduler visibility.
    h_ref[...] = jax.lax.fori_loop(0, t_chunk, step, h_ref[...], unroll=True)


def rnn_forward(x, w_hidden, b_hidden, *, t_chunk=None, matmul_dtype=jnp.float32):
    """Run the RNN recurrence with a Pallas kernel.

    x        : (seq, B, D_in)
    w_hidden : (D_hidden, D_in + D_hidden)   -- nn.Linear weight layout
    b_hidden : (D_hidden,)
    returns  : (seq, B, D_hidden)  stacked hidden states (== self.list_h)
    """
    seq, B, D_in = x.shape
    D_hidden = w_hidden.shape[0]
    f32 = jnp.float32

    # Sublane/lane-dense internal layout.
    b_pad = _round_up(B, 8)
    dh_pad = _round_up(D_hidden, 128)
    if t_chunk is None:
        # Small sequences: a single chunk == grid-less recurrence with x fully
        # resident in VMEM.  Larger seq gets chunked in blocks of 128 steps.
        t_chunk = min(seq, 128)
    seq_pad = _round_up(seq, t_chunk)
    n_chunks = seq_pad // t_chunk

    # Split the concatenated nn.Linear weight (matches torch.cat((x, h), dim=1)),
    # pre-transpose, and zero-pad.  Zero padding keeps the padded hidden units
    # exactly 0 (tanh(0) = 0) and non-interacting with the real ones.
    wx_t = jnp.zeros((D_in, dh_pad), f32).at[:, :D_hidden].set(
        w_hidden[:, :D_in].astype(f32).T)
    wh_t = jnp.zeros((dh_pad, dh_pad), f32).at[:D_hidden, :D_hidden].set(
        w_hidden[:, D_in:].astype(f32).T)
    b2d = jnp.zeros((1, dh_pad), f32).at[0, :D_hidden].set(b_hidden.astype(f32))

    # Pad (time, batch) and flatten to a 2-D, sublane-aligned slab so every
    # DMA/load/store in the kernel is unmasked and lane-dense.
    x_p = jnp.zeros((seq_pad, b_pad, D_in), f32).at[:seq, :B, :].set(x.astype(f32))
    x_flat = x_p.reshape(seq_pad * b_pad, D_in)

    # Optional bf16 MXU operands (carry/activation stay f32 inside the kernel).
    x_flat = x_flat.astype(matmul_dtype)
    wx_t = wx_t.astype(matmul_dtype)
    wh_t = wh_t.astype(matmul_dtype)

    kernel = functools.partial(rnn_kernel, t_chunk=t_chunk, b_pad=b_pad)

    grid_spec = pltpu.PrefetchScalarGridSpec(
        num_scalar_prefetch=0,
        grid=(n_chunks,),
        in_specs=[
            pl.BlockSpec((t_chunk * b_pad, D_in), lambda c: (c, 0)),
            pl.BlockSpec((D_in, dh_pad), lambda c: (0, 0)),
            # Constant index_map -> weight tile is never re-fetched across
            # chunks.  For large D_hidden on v7x (64 MiB VMEM) this should also
            # be single-buffered / column-tiled and cast to bf16.
            pl.BlockSpec((dh_pad, dh_pad), lambda c: (0, 0)),
            pl.BlockSpec((1, dh_pad), lambda c: (0, 0)),
        ],
        out_specs=pl.BlockSpec((t_chunk * b_pad, dh_pad), lambda c: (c, 0)),
        scratch_shapes=[pltpu.VMEM((b_pad, dh_pad), jnp.float32)],
    )

    out_flat = pl.pallas_call(
        kernel,
        out_shape=jax.ShapeDtypeStruct((seq_pad * b_pad, dh_pad), jnp.float32),
        grid_spec=grid_spec,
        compiler_params=pltpu.CompilerParams(
            # Time is inherently serial.  (On v7x with large batch, add a
            # leading "parallel" batch-shard grid axis to use the second TC.)
            dimension_semantics=("arbitrary",),
            vmem_limit_bytes=32 * 1024 * 1024,
        ),
    )(x_flat, wx_t, wh_t, b2d)

    hs = out_flat.reshape(seq_pad, b_pad, dh_pad)[:seq, :B, :D_hidden]
    return hs


def rnn_forward_ref(x, w_hidden, b_hidden):
    """Pure-JAX reference (mirrors the PyTorch loop) for sanity checking."""
    seq, B, D_in = x.shape
    D_hidden = w_hidden.shape[0]

    def step(h, x_t):
        cat = jnp.concatenate([x_t, h], axis=1)
        h_new = jnp.tanh(cat @ w_hidden.T + b_hidden)
        return h_new, h_new

    h0 = jnp.zeros((B, D_hidden), jnp.float32)
    _, hs = jax.lax.scan(step, h0, x)
    return hs


if __name__ == "__main__":
    # Small shapes implied by the module: x is (seq, batch, D_in).
    seq, B, D_in, D_hidden = 8, 4, 16, 32

    key = jax.random.PRNGKey(0)
    k_x, k_w, k_b = jax.random.split(key, 3)

    x = jax.random.normal(k_x, (seq, B, D_in), dtype=jnp.float32)

    # Deterministic PyTorch-style init for nn.Linear(D_in + D_hidden, D_hidden):
    # U(-1/sqrt(fan_in), 1/sqrt(fan_in)) with fan_in = D_in + D_hidden.
    fan_in = D_in + D_hidden
    bound = 1.0 / jnp.sqrt(jnp.float32(fan_in))
    w_hidden = jax.random.uniform(
        k_w, (D_hidden, fan_in), minval=-bound, maxval=bound, dtype=jnp.float32
    )
    b_hidden = jax.random.uniform(
        k_b, (D_hidden,), minval=-bound, maxval=bound, dtype=jnp.float32
    )

    # TODO(synk): decoder() (linear_out over the last `horizon` hidden states)
    # is not part of forward(); it is plain glue (a small matmul per step) and
    # is omitted here.

    hs = rnn_forward(x, w_hidden, b_hidden)
    hs = jax.block_until_ready(hs)

    hs_ref = rnn_forward_ref(x, w_hidden, b_hidden)
    assert hs.shape == (seq, B, D_hidden)
    assert jnp.max(jnp.abs(hs - hs_ref)) < 1e-4

    print("KERNEL_OK")
</pallas_src>

<mosaic_0001>
module attributes {stable_mosaic.version = 11 : i64} {
  func.func @rnn_kernel(%arg0: i32, %arg1: memref<64x16xf32, #tpu.memory_space<vmem>>, %arg2: memref<16x128xf32, #tpu.memory_space<vmem>>, %arg3: memref<128x128xf32, #tpu.memory_space<vmem>>, %arg4: memref<1x128xf32, #tpu.memory_space<vmem>>, %arg5: memref<64x128xf32, #tpu.memory_space<vmem>>, %arg6: memref<8x128xf32, #tpu.memory_space<vmem>>) attributes {dimension_semantics = [#tpu.dimension_semantics<arbitrary>], iteration_bounds = array<i64: 1>, scalar_prefetch = 0 : i64, scratch_operands = 1 : i64, tpu.core_type = #tpu.core_type<tc>, window_params = [{transform_indices = @transform_0, window_bounds = array<i64: 64, 16>}, {pipeline_mode = #tpu.pipeline_mode<synchronous>, transform_indices = @transform_1, window_bounds = array<i64: 16, 128>}, {pipeline_mode = #tpu.pipeline_mode<synchronous>, transform_indices = @transform_2, window_bounds = array<i64: 128, 128>}, {pipeline_mode = #tpu.pipeline_mode<synchronous>, transform_indices = @transform_3, window_bounds = array<i64: 1, 128>}, {transform_indices = @transform_4, window_bounds = array<i64: 64, 128>}]} {
    %c0_i32 = arith.constant 0 : i32
    %0 = arith.cmpi eq, %arg0, %c0_i32 : i32
    %1 = arith.extui %0 : i1 to i32
    %c0_i32_0 = arith.constant 0 : i32
    %2 = arith.cmpi ne, %1, %c0_i32_0 : i32
    scf.if %2 {
      %cst_47 = arith.constant 0.000000e+00 : f32
      %85 = vector.broadcast %cst_47 : f32 to vector<8x128xf32>
      %c0_48 = arith.constant 0 : index
      %c0_49 = arith.constant 0 : index
      %86 = vector.load %arg6[%c0_48, %c0_49] : memref<8x128xf32, #tpu.memory_space<vmem>>, vector<8x128xf32>
      tpu.vector_store %arg6[%c0_48, %c0_49], %85 {strides = array<i32>} : memref<8x128xf32, #tpu.memory_space<vmem>>, vector<8x128xf32>,
    } else {
    }
    %c0 = arith.constant 0 : index
    %c0_1 = arith.constant 0 : index
    %3 = vector.load %arg1[%c0, %c0_1] : memref<64x16xf32, #tpu.memory_space<vmem>>, vector<64x16xf32>
    %c0_2 = arith.constant 0 : index
    %c0_3 = arith.constant 0 : index
    %4 = vector.load %arg2[%c0_2, %c0_3] : memref<16x128xf32, #tpu.memory_space<vmem>>, vector<16x128xf32>
    %cst = arith.constant dense<0.000000e+00> : vector<64x128xf32>
    %5 = tpu.matmul %3, %4, %cst {dimension_numbers = #tpu.dot_dimension_numbers<[1], [0], [0], [1], [0, 0, 1, 1], [], []>} : vector<64x16xf32>, vector<16x128xf32>, vector<64x128xf32> -> vector<64x128xf32>
    %c0_4 = arith.constant 0 : index
    %c0_5 = arith.constant 0 : index
    %6 = vector.load %arg4[%c0_4, %c0_5] : memref<1x128xf32, #tpu.memory_space<vmem>>, vector<1x128xf32>
    %7 = vector.broadcast %6 : vector<1x128xf32> to vector<64x128xf32>
    %8 = arith.addf %5, %7 : vector<64x128xf32>
    %c0_6 = arith.constant 0 : index
    %c0_7 = arith.constant 0 : index
    %9 = vector.load %arg5[%c0_6, %c0_7] : memref<64x128xf32, #tpu.memory_space<vmem>>, vector<64x128xf32>
    tpu.vector_store %arg5[%c0_6, %c0_7], %8 {strides = array<i32>} : memref<64x128xf32, #tpu.memory_space<vmem>>, vector<64x128xf32>,
    %c0_8 = arith.constant 0 : index
    %c0_9 = arith.constant 0 : index
    %10 = vector.load %arg3[%c0_8, %c0_9] : memref<128x128xf32, #tpu.memory_space<vmem>>, vector<128x128xf32>
    %c0_10 = arith.constant 0 : index
    %c0_11 = arith.constant 0 : index
    %11 = vector.load %arg6[%c0_10, %c0_11] : memref<8x128xf32, #tpu.memory_space<vmem>>, vector<8x128xf32>
    %c0_i32_12 = arith.constant 0 : i32
    %c8_i32 = arith.constant 8 : i32
    %12 = arith.muli %c0_i32_12, %c8_i32 : i32
    %13 = tpu.assume_multiple %12, 8 : i32
    %14 = arith.index_cast %13 : i32 to index
    %c0_13 = arith.constant 0 : index
    %15 = vector.load %arg5[%14, %c0_13] : memref<64x128xf32, #tpu.memory_space<vmem>>, vector<8x128xf32>
    %cst_14 = arith.constant dense<0.000000e+00> : vector<8x128xf32>
    %16 = tpu.matmul %11, %10, %cst_14 {dimension_numbers = #tpu.dot_dimension_numbers<[1], [0], [0], [1], [0, 0, 1, 1], [], []>} : vector<8x128xf32>, vector<128x128xf32>, vector<8x128xf32> -> vector<8x128xf32>
    %17 = arith.addf %15, %16 : vector<8x128xf32>
    %18 = math.tanh %17 : vector<8x128xf32>
    %19 = arith.index_cast %13 : i32 to index
    %c0_15 = arith.constant 0 : index
    %20 = vector.load %arg5[%19, %c0_15] : memref<64x128xf32, #tpu.memory_space<vmem>>, vector<8x128xf32>
    tpu.vector_store %arg5[%19, %c0_15], %18 {strides = array<i32>} : memref<64x128xf32, #tpu.memory_space<vmem>>, vector<8x128xf32>,
    %c1_i32 = arith.constant 1 : i32
    %c8_i32_16 = arith.constant 8 : i32
    %21 = arith.muli %c1_i32, %c8_i32_16 : i32
    %22 = tpu.assume_multiple %21, 8 : i32
    %23 = arith.index_cast %22 : i32 to index
    %c0_17 = arith.constant 0 : index
    %24 = vector.load %arg5[%23, %c0_17] : memref<64x128xf32, #tpu.memory_space<vmem>>, vector<8x128xf32>
    %cst_18 = arith.constant dense<0.000000e+00> : vector<8x128xf32>
    %25 = tpu.matmul %18, %10, %cst_18 {dimension_numbers = #tpu.dot_dimension_numbers<[1], [0], [0], [1], [0, 0, 1, 1], [], []>} : vector<8x128xf32>, vector<128x128xf32>, vector<8x128xf32> -> vector<8x128xf32>
    %26 = arith.addf %24, %25 : vector<8x128xf32>
    %27 = math.tanh %26 : vector<8x128xf32>
    %28 = arith.index_cast %22 : i32 to index
    %c0_19 = arith.constant 0 : index
    %29 = vector.load %arg5[%28, %c0_19] : memref<64x128xf32, #tpu.memory_space<vmem>>, vector<8x128xf32>
    tpu.vector_store %arg5[%28, %c0_19], %27 {strides = array<i32>} : memref<64x128xf32, #tpu.memory_space<vmem>>, vector<8x128xf32>,
    %c2_i32 = arith.constant 2 : i32
    %c8_i32_20 = arith.constant 8 : i32
    %30 = arith.muli %c2_i32, %c8_i32_20 : i32
    %31 = tpu.assume_multiple %30, 8 : i32
    %32 = arith.index_cast %31 : i32 to index
    %c0_21 = arith.constant 0 : index
    %33 = vector.load %arg5[%32, %c0_21] : memref<64x128xf32, #tpu.memory_space<vmem>>, vector<8x128xf32>
    %cst_22 = arith.constant dense<0.000000e+00> : vector<8x128xf32>
    %34 = tpu.matmul %27, %10, %cst_22 {dimension_numbers = #tpu.dot_dimension_numbers<[1], [0], [0], [1], [0, 0, 1, 1], [], []>} : vector<8x128xf32>, vector<128x128xf32>, vector<8x128xf32> -> vector<8x128xf32>
    %35 = arith.addf %33, %34 : vector<8x128xf32>
    %36 = math.tanh %35 : vector<8x128xf32>
    %37 = arith.index_cast %31 : i32 to index
    %c0_23 = arith.constant 0 : index
    %38 = vector.load %arg5[%37, %c0_23] : memref<64x128xf32, #tpu.memory_space<vmem>>, vector<8x128xf32>
    tpu.vector_store %arg5[%37, %c0_23], %36 {strides = array<i32>} : memref<64x128xf32, #tpu.memory_space<vmem>>, vector<8x128xf32>,
    %c3_i32 = arith.constant 3 : i32
    %c8_i32_24 = arith.constant 8 : i32
    %39 = arith.muli %c3_i32, %c8_i32_24 : i32
    %40 = tpu.assume_multiple %39, 8 : i32
    %41 = arith.index_cast %40 : i32 to index
    %c0_25 = arith.constant 0 : index
    %42 = vector.load %arg5[%41, %c0_25] : memref<64x128xf32, #tpu.memory_space<vmem>>, vector<8x128xf32>
    %cst_26 = arith.constant dense<0.000000e+00> : vector<8x128xf32>
    %43 = tpu.matmul %36, %10, %cst_26 {dimension_numbers = #tpu.dot_dimension_numbers<[1], [0], [0], [1], [0, 0, 1, 1], [], []>} : vector<8x128xf32>, vector<128x128xf32>, vector<8x128xf32> -> vector<8x128xf32>
    %44 = arith.addf %42, %43 : vector<8x128xf32>
    %45 = math.tanh %44 : vector<8x128xf32>
    %46 = arith.index_cast %40 : i32 to index
    %c0_27 = arith.constant 0 : index
    %47 = vector.load %arg5[%46, %c0_27] : memref<64x128xf32, #tpu.memory_space<vmem>>, vector<8x128xf32>
    tpu.vector_store %arg5[%46, %c0_27], %45 {strides = array<i32>} : memref<64x128xf32, #tpu.memory_space<vmem>>, vector<8x128xf32>,
    %c4_i32 = arith.constant 4 : i32
    %c8_i32_28 = arith.constant 8 : i32
    %48 = arith.muli %c4_i32, %c8_i32_28 : i32
    %49 = tpu.assume_multiple %48, 8 : i32
    %50 = arith.index_cast %49 : i32 to index
    %c0_29 = arith.constant 0 : index
    %51 = vector.load %arg5[%50, %c0_29] : memref<64x128xf32, #tpu.memory_space<vmem>>, vector<8x128xf32>
    %cst_30 = arith.constant dense<0.000000e+00> : vector<8x128xf32>
    %52 = tpu.matmul %45, %10, %cst_30 {dimension_numbers = #tpu.dot_dimension_numbers<[1], [0], [0], [1], [0, 0, 1, 1], [], []>} : vector<8x128xf32>, vector<128x128xf32>, vector<8x128xf32> -> vector<8x128xf32>
    %53 = arith.addf %51, %52 : vector<8x128xf32>
    %54 = math.tanh %53 : vector<8x128xf32>
    %55 = arith.index_cast %49 : i32 to index
    %c0_31 = arith.constant 0 : index
    %56 = vector.load %arg5[%55, %c0_31] : memref<64x128xf32, #tpu.memory_space<vmem>>, vector<8x128xf32>
    tpu.vector_store %arg5[%55, %c0_31], %54 {strides = array<i32>} : memref<64x128xf32, #tpu.memory_space<vmem>>, vector<8x128xf32>,
    %c5_i32 = arith.constant 5 : i32
    %c8_i32_32 = arith.constant 8 : i32
    %57 = arith.muli %c5_i32, %c8_i32_32 : i32
    %58 = tpu.assume_multiple %57, 8 : i32
    %59 = arith.index_cast %58 : i32 to index
    %c0_33 = arith.constant 0 : index
    %60 = vector.load %arg5[%59, %c0_33] : memref<64x128xf32, #tpu.memory_space<vmem>>, vector<8x128xf32>
    %cst_34 = arith.constant dense<0.000000e+00> : vector<8x128xf32>
    %61 = tpu.matmul %54, %10, %cst_34 {dimension_numbers = #tpu.dot_dimension_numbers<[1], [0], [0], [1], [0, 0, 1, 1], [], []>} : vector<8x128xf32>, vector<128x128xf32>, vector<8x128xf32> -> vector<8x128xf32>
    %62 = arith.addf %60, %61 : vector<8x128xf32>
    %63 = math.tanh %62 : vector<8x128xf32>
    %64 = arith.index_cast %58 : i32 to index
    %c0_35 = arith.constant 0 : index
    %65 = vector.load %arg5[%64, %c0_35] : memref<64x128xf32, #tpu.memory_space<vmem>>, vector<8x128xf32>
    tpu.vector_store %arg5[%64, %c0_35], %63 {strides = array<i32>} : memref<64x128xf32, #tpu.memory_space<vmem>>, vector<8x128xf32>,
    %c6_i32 = arith.constant 6 : i32
    %c8_i32_36 = arith.constant 8 : i32
    %66 = arith.muli %c6_i32, %c8_i32_36 : i32
    %67 = tpu.assume_multiple %66, 8 : i32
    %68 = arith.index_cast %67 : i32 to index
    %c0_37 = arith.constant 0 : index
    %69 = vector.load %arg5[%68, %c0_37] : memref<64x128xf32, #tpu.memory_space<vmem>>, vector<8x128xf32>
    %cst_38 = arith.constant dense<0.000000e+00> : vector<8x128xf32>
    %70 = tpu.matmul %63, %10, %cst_38 {dimension_numbers = #tpu.dot_dimension_numbers<[1], [0], [0], [1], [0, 0, 1, 1], [], []>} : vector<8x128xf32>, vector<128x128xf32>, vector<8x128xf32> -> vector<8x128xf32>
    %71 = arith.addf %69, %70 : vector<8x128xf32>
    %72 = math.tanh %71 : vector<8x128xf32>
    %73 = arith.index_cast %67 : i32 to index
    %c0_39 = arith.constant 0 : index
    %74 = vector.load %arg5[%73, %c0_39] : memref<64x128xf32, #tpu.memory_space<vmem>>, vector<8x128xf32>
    tpu.vector_store %arg5[%73, %c0_39], %72 {strides = array<i32>} : memref<64x128xf32, #tpu.memory_space<vmem>>, vector<8x128xf32>,
    %c7_i32 = arith.constant 7 : i32
    %c8_i32_40 = arith.constant 8 : i32
    %75 = arith.muli %c7_i32, %c8_i32_40 : i32
    %76 = tpu.assume_multiple %75, 8 : i32
    %77 = arith.index_cast %76 : i32 to index
    %c0_41 = arith.constant 0 : index
    %78 = vector.load %arg5[%77, %c0_41] : memref<64x128xf32, #tpu.memory_space<vmem>>, vector<8x128xf32>
    %cst_42 = arith.constant dense<0.000000e+00> : vector<8x128xf32>
    %79 = tpu.matmul %72, %10, %cst_42 {dimension_numbers = #tpu.dot_dimension_numbers<[1], [0], [0], [1], [0, 0, 1, 1], [], []>} : vector<8x128xf32>, vector<128x128xf32>, vector<8x128xf32> -> vector<8x128xf32>
    %80 = arith.addf %78, %79 : vector<8x128xf32>
    %81 = math.tanh %80 : vector<8x128xf32>
    %82 = arith.index_cast %76 : i32 to index
    %c0_43 = arith.constant 0 : index
    %83 = vector.load %arg5[%82, %c0_43] : memref<64x128xf32, #tpu.memory_space<vmem>>, vector<8x128xf32>
    tpu.vector_store %arg5[%82, %c0_43], %81 {strides = array<i32>} : memref<64x128xf32, #tpu.memory_space<vmem>>, vector<8x128xf32>,
    %c8_i32_44 = arith.constant 8 : i32
    %c0_45 = arith.constant 0 : index
    %c0_46 = arith.constant 0 : index
    %84 = vector.load %arg6[%c0_45, %c0_46] : memref<8x128xf32, #tpu.memory_space<vmem>>, vector<8x128xf32>
    tpu.vector_store %arg6[%c0_45, %c0_46], %81 {strides = array<i32>} : memref<8x128xf32, #tpu.memory_space<vmem>>, vector<8x128xf32>,
    return
  }
  func.func @transform_0(%arg0: i32) -> (i32, i32) {
    %c0_i32 = arith.constant 0 : i32
    %c0_i32_0 = arith.constant 0 : i32
    return %arg0, %c0_i32 : i32, i32
  }
  func.func @transform_1(%arg0: i32) -> (i32, i32) {
    %c0_i32 = arith.constant 0 : i32
    %c0_i32_0 = arith.constant 0 : i32
    %c0_i32_1 = arith.constant 0 : i32
    return %c0_i32, %c0_i32_0 : i32, i32
  }
  func.func @transform_2(%arg0: i32) -> (i32, i32) {
    %c0_i32 = arith.constant 0 : i32
    %c0_i32_0 = arith.constant 0 : i32
    %c0_i32_1 = arith.constant 0 : i32
    return %c0_i32, %c0_i32_0 : i32, i32
  }
  func.func @transform_3(%arg0: i32) -> (i32, i32) {
    %c0_i32 = arith.constant 0 : i32
    %c0_i32_0 = arith.constant 0 : i32
    %c0_i32_1 = arith.constant 0 : i32
    return %c0_i32, %c0_i32_0 : i32, i32
  }
  func.func @transform_4(%arg0: i32) -> (i32, i32) {
    %c0_i32 = arith.constant 0 : i32
    %c0_i32_0 = arith.constant 0 : i32
    return %arg0, %c0_i32 : i32, i32
  }
}

</mosaic_0001>

<llo_original>
// kernel: tpu_custom_call.1
$region0: #{tpu_custom_call.1}
  #allocation0 [shape = 'u32[]', space=smem, size = 0x4, offset = 0x4, fixed_abs, tag = 'smem constant byte address 0x4 - core index']
  #allocation1 [shape = 'u32[144,128]{1,0:T(1,128)}', space=vmem, size = 0x12000, scoped, tag = 'internal scratch']
  #allocation2 [shape = 'f32[8,128]{1,0:T(8,128)}', space=vmem, size = 0x1000, scoped, tag = 'scratch operand']
  %s0 = inlined_call_operand.vmem [shape: f32[64,16], index: 0, kind: input, shape index: {}]
  %s1 = inlined_call_operand.vmem [shape: f32[16,128], index: 1, kind: input, shape index: {}]
  %s2 = inlined_call_operand.hbm [shape: f32[128,128], index: 2, kind: input, shape index: {}]
  %s3 = inlined_call_operand.vmem [shape: f32[1,128], index: 3, kind: input, shape index: {}]
  %s4 = inlined_call_operand.hbm [shape: f32[64,128], index: 4, kind: output, shape index: {}]
  %s5 = sld [smem:[#allocation0]]
  $region34: #{tpu_custom_call.1} parent=0
    _
  %s7 = ssub.s32 1, %s5
  %s8 = scalar_select 0, %s7, %s5
  $region1: #{tpu_custom_call.1} parent=0
    #allocation3 [shape = 'u8[65536]{0}', space=vmem, size = 0x10000, scoped, tag = 'input window, operand 2, single buffered']
    #allocation4 [shape = 's32[1]{0}', space=sflag, size = 0x4, scoped, tag = 'scoped memory for tpu_custom_call.1']
    #allocation5 [shape = 's32[1]{0}', space=sflag, size = 0x4, scoped, tag = 'scoped memory for tpu_custom_call.1']
    #allocation6 [shape = 'u8[32768]{0}', space=vmem, size = 0x8000, scoped, tag = 'output window, operand 0, single buffered']
    %9 = vsyncpa [#allocation4], 0
    %10 = vsyncpa [#allocation5], 0
    // Predicated region
    $region2: #{tpu_custom_call.1} parent=1 // pred_check
      _
    $region3: #{tpu_custom_call.1} parent=1 // pred_check_branch
      %12 = sbr.rel (0) target = $region5
    $region4: #{tpu_custom_call.1} parent=1 // pred_region
      _
    $region5: #{tpu_custom_call.1} parent=1 // pred_fallthru
      _
    // Predicated region
    $region6: #{tpu_custom_call.1} parent=1 // pred_check
      _
    $region7: #{tpu_custom_call.1} parent=1 // pred_check_branch
      %14 = sbr.rel (0) target = $region9
    $region8: #{tpu_custom_call.1} parent=1 // pred_region
      _
    $region9: #{tpu_custom_call.1} parent=1 // pred_fallthru
      _
    // Predicated region
    $region10: #{tpu_custom_call.1} parent=1 // pred_check
      _
    $region11: #{tpu_custom_call.1} parent=1 // pred_check_branch
      %16 = sbr.rel (0) target = $region13
    $region12: #{tpu_custom_call.1} parent=1 // pred_region
      %s18 = ssub.s32 2048, 2048
      %19 = vsyncadd [#allocation4], %s18
      %s20 = sshll.u32 [#allocation3], 4
      %s21 = int_to_ptr.vmem [resolvable:$true] %s20
      %26 = dma.hbm_to_vmem [thread:$0]  %s2, 2048, %s21, [#allocation4], 128, 128, 8
    $region13: #{tpu_custom_call.1} parent=1 // pred_fallthru
      _
    // Predicated region
    $region14: #{tpu_custom_call.1} parent=1 // pred_check
      _
    $region15: #{tpu_custom_call.1} parent=1 // pred_check_branch
      %28 = sbr.rel (0) target = $region17
    $region16: #{tpu_custom_call.1} parent=1 // pred_region
      _
    $region17: #{tpu_custom_call.1} parent=1 // pred_fallthru
      _
    // Predicated region
    $region18: #{tpu_custom_call.1} parent=1 // pred_check
      _
    $region19: #{tpu_custom_call.1} parent=1 // pred_check_branch
      %30 = sbr.rel (0) target = $region21
    $region20: #{tpu_custom_call.1} parent=1 // pred_region
      %31 = dma.done [#allocation4], 2048
    $region21: #{tpu_custom_call.1} parent=1 // pred_fallthru
      _
    %p32 = scmp.eq.s32.totalorder 0, 0
    // Predicated region
    $region22: #{tpu_custom_call.1} parent=1 // pred_check
      %p33 = pneg %p32
    $region23: #{tpu_custom_call.1} parent=1 // pred_check_branch
      %35 = sbr.rel (%p33) target = $region25
    $region24: #{tpu_custom_call.1} parent=1 // pred_region
      %36 = vst [vmem:[#allocation2] sm:$0xff] 0.0
    $region25: #{tpu_custom_call.1} parent=1 // pred_fallthru
      _
    %v37 = vld [vmem:[%s0] sm:$0xff]
    %v38 = vld [vmem:[%s0 + $0x8] sm:$0xff]
    %v39 = vld [vmem:[%s0 + $0x10] sm:$0xff]
    %v40 = vld [vmem:[%s0 + $0x18] sm:$0xff]
    %v41 = vld [vmem:[%s0 + $0x20] sm:$0xff]
    %v42 = vld [vmem:[%s0 + $0x28] sm:$0xff]
    %v43 = vld [vmem:[%s0 + $0x30] sm:$0xff]
    %v44 = vld [vmem:[%s0 + $0x38] sm:$0xff]
    %v45 = vld [vmem:[%s1] sm:$0xff]
    %v46 = vld [vmem:[%s1 + $0x8] sm:$0xff]
    %v47 = vld [vmem:[%s3] sm:$0x1]
    %v49 = vlaneseq
    %v50 = vshrl.u32 %v49, 7
    %v51 = vsub.s32 0, %v50
    %v52 = vrot.slane %v47, %v51
    %vm54 = vcmask 130048
    %v56 = vsel %vm54, %v37, 0
    %v59 = vsel %vm54, %v38, 0
    %v62 = vsel %vm54, %v39, 0
    %v65 = vsel %vm54, %v40, 0
    %v68 = vsel %vm54, %v41, 0
    %v71 = vsel %vm54, %v42, 0
    %v74 = vsel %vm54, %v43, 0
    %v77 = vsel %vm54, %v44, 0
    %79 = vmatprep.subr.mxu0 0.0
    %80 = vmatpush1.msra.mxu0 %v45
    %81 = vmatprep.subr.mxu0 0.0
    %82 = vmatpush1.msra.mxu0 %v46
    %83 = vmatprep.subr.mxu0 0.0
    %84 = vmatpush1.msra.mxu0 0.0
    %85 = vmatprep.subr.mxu0 0.0
    %86 = vmatpush1.msra.mxu0 0.0
    %87 = vmatprep.subr.mxu0 0.0
    %88 = vmatpush1.msra.mxu0 0.0
    %89 = vmatprep.subr.mxu0 0.0
    %90 = vmatpush1.msra.mxu0 0.0
    %91 = vmatprep.subr.mxu0 0.0
    %92 = vmatpush1.msra.mxu0 0.0
    %93 = vmatprep.subr.mxu0 0.0
    %94 = vmatpush1.msra.mxu0 0.0
    %95 = vmatprep.subr.mxu0 0.0
    %96 = vmatpush1.msra.mxu0 0.0
    %97 = vmatprep.subr.mxu0 0.0
    %98 = vmatpush1.msra.mxu0 0.0
    %99 = vmatprep.subr.mxu0 0.0
    %100 = vmatpush1.msra.mxu0 0.0
    %101 = vmatprep.subr.mxu0 0.0
    %102 = vmatpush1.msra.mxu0 0.0
    %103 = vmatprep.subr.mxu0 0.0
    %104 = vmatpush1.msra.mxu0 0.0
    %105 = vmatprep.subr.mxu0 0.0
    %106 = vmatpush1.msra.mxu0 0.0
    %107 = vmatprep.subr.mxu0 0.0
    %108 = vmatpush1.msra.mxu0 0.0
    %109 = vmatprep.subr.mxu0 0.0
    %110 = vmatpush1.msra.mxu0 0.0
    %111 = vmatprep.subr.mxu0 0.0
    %112 = vmatpush1.msra.mxu0 0.0
    %113 = vmatprep.subr.mxu0 0.0
    %114 = vmatpush1.msra.mxu0 0.0
    %115 = vmatprep.subr.mxu0 0.0
    %116 = vmatpush1.msra.mxu0 0.0
    %117 = vmatprep.subr.mxu0 0.0
    %118 = vmatpush1.msra.mxu0 0.0
    %119 = vmatprep.subr.mxu0 0.0
    %120 = vmatpush1.msra.mxu0 0.0
    %121 = vmatprep.subr.mxu0 0.0
    %122 = vmatpush1.msra.mxu0 0.0
    %123 = vmatprep.subr.mxu0 0.0
    %124 = vmatpush1.msra.mxu0 0.0
    %125 = vmatprep.subr.mxu0 0.0
    %126 = vmatpush1.msra.mxu0 0.0
    %127 = vmatprep.subr.mxu0 0.0
    %128 = vmatpush1.msra.mxu0 0.0
    %129 = vmatprep.subr.mxu0 0.0
    %130 = vmatpush1.msra.mxu0 0.0
    %131 = vmatprep.subr.mxu0 0.0
    %132 = vmatpush1.msra.mxu0 0.0
    %133 = vmatprep.subr.mxu0 0.0
    %134 = vmatpush1.msra.mxu0 0.0
    %135 = vmatprep.subr.mxu0 0.0
    %136 = vmatpush1.msra.mxu0 0.0
    %137 = vmatprep.subr.mxu0 0.0
    %138 = vmatpush1.msra.mxu0 0.0
    %139 = vmatprep.subr.mxu0 0.0
    %140 = vmatpush1.msra.mxu0 0.0
    %141 = vmatprep.subr.mxu0 0.0
    %142 = vmatpush1.msra.mxu0 0.0
    %143 = vmatprep.mubr.f32.mxu0 0.0
    %144 = vmatmul.mubr.f32.gmra.mrb[0].mxu0 %v56
    %v145 = vpop.f32.mrb[0].mxu0
    %v146 = vadd.f32 %v52, %v145
    %v147 = vpop.f32.mrb[0].mxu0
    %148 = vmatprep.mubr.f32.mxu0 0.0
    %149 = vmatmul.mubr.f32.gmra.mrb[0].mxu0 %v59
    %v150 = vpop.f32.mrb[0].mxu0
    %v151 = vadd.f32 %v52, %v150
    %v152 = vpop.f32.mrb[0].mxu0
    %153 = vmatprep.mubr.f32.mxu0 0.0
    %154 = vmatmul.mubr.f32.gmra.mrb[0].mxu0 %v62
    %v155 = vpop.f32.mrb[0].mxu0
    %v156 = vadd.f32 %v52, %v155
    %v157 = vpop.f32.mrb[0].mxu0
    %158 = vmatprep.mubr.f32.mxu0 0.0
    %159 = vmatmul.mubr.f32.gmra.mrb[0].mxu0 %v65
    %v160 = vpop.f32.mrb[0].mxu0
    %v161 = vadd.f32 %v52, %v160
    %v162 = vpop.f32.mrb[0].mxu0
    %163 = vmatprep.mubr.f32.mxu0 0.0
    %164 = vmatmul.mubr.f32.gmra.mrb[0].mxu0 %v68
    %v165 = vpop.f32.mrb[0].mxu0
    %v166 = vadd.f32 %v52, %v165
    %v167 = vpop.f32.mrb[0].mxu0
    %168 = vmatprep.mubr.f32.mxu0 0.0
    %169 = vmatmul.mubr.f32.gmra.mrb[0].mxu0 %v71
    %v170 = vpop.f32.mrb[0].mxu0
    %v171 = vadd.f32 %v52, %v170
    %v172 = vpop.f32.mrb[0].mxu0
    %173 = vmatprep.mubr.f32.mxu0 0.0
    %174 = vmatmul.mubr.f32.gmra.mrb[0].mxu0 %v74
    %v175 = vpop.f32.mrb[0].mxu0
    %v176 = vadd.f32 %v52, %v175
    %v177 = vpop.f32.mrb[0].mxu0
    %178 = vmatprep.mubr.f32.mxu0 0.0
    %179 = vmatmul.mubr.f32.gmra.mrb[0].mxu0 %v77
    %v180 = vpop.f32.mrb[0].mxu0
    %v181 = vadd.f32 %v52, %v180
    %v182 = vpop.f32.mrb[0].mxu0
    %183 = vdwg.mxu0
    %184 = vst [vmem:[#allocation6] sm:$0xff] %v146
    %185 = vst [vmem:[#allocation6 + $0x8] sm:$0xff] %v151
    %186 = vst [vmem:[#allocation6 + $0x10] sm:$0xff] %v156
    %187 = vst [vmem:[#allocation6 + $0x18] sm:$0xff] %v161
    %188 = vst [vmem:[#allocation6 + $0x20] sm:$0xff] %v166
    %189 = vst [vmem:[#allocation6 + $0x28] sm:$0xff] %v171
    %190 = vst [vmem:[#allocation6 + $0x30] sm:$0xff] %v176
    %191 = vst [vmem:[#allocation6 + $0x38] sm:$0xff] %v181
    %v192 = vld [vmem:[#allocation3] sm:$0xff]
    %v193 = vld [vmem:[#allocation3 + $0x8] sm:$0xff]
    %v194 = vld [vmem:[#allocation3 + $0x10] sm:$0xff]
    %v195 = vld [vmem:[#allocation3 + $0x18] sm:$0xff]
    %v196 = vld [vmem:[#allocation3 + $0x20] sm:$0xff]
    %v197 = vld [vmem:[#allocation3 + $0x28] sm:$0xff]
    %v198 = vld [vmem:[#allocation3 + $0x30] sm:$0xff]
    %v199 = vld [vmem:[#allocation3 + $0x38] sm:$0xff]
    %v200 = vld [vmem:[#allocation3 + $0x40] sm:$0xff]
    %v201 = vld [vmem:[#allocation3 + $0x48] sm:$0xff]
    %v202 = vld [vmem:[#allocation3 + $0x50] sm:$0xff]
    %v203 = vld [vmem:[#allocation3 + $0x58] sm:$0xff]
    %v204 = vld [vmem:[#allocation3 + $0x60] sm:$0xff]
    %v205 = vld [vmem:[#allocation3 + $0x68] sm:$0xff]
    %v206 = vld [vmem:[#allocation3 + $0x70] sm:$0xff]
    %v207 = vld [vmem:[#allocation3 + $0x78] sm:$0xff]
    %v208 = vld [vmem:[#allocation2] sm:$0xff]
    %v209 = vld [vmem:[#allocation6] sm:$0xff]
    %210 = vmatprep.subr.mxu0 0.0
    %211 = vmatpush1.msra.mxu0 %v192
    %212 = vmatprep.subr.mxu0 0.0
    %213 = vmatpush1.msra.mxu0 %v193
    %214 = vmatprep.subr.mxu0 0.0
    %215 = vmatpush1.msra.mxu0 %v194
    %216 = vmatprep.subr.mxu0 0.0
    %217 = vmatpush1.msra.mxu0 %v195
    %218 = vmatprep.subr.mxu0 0.0
    %219 = vmatpush1.msra.mxu0 %v196
    %220 = vmatprep.subr.mxu0 0.0
    %221 = vmatpush1.msra.mxu0 %v197
    %222 = vmatprep.subr.mxu0 0.0
    %223 = vmatpush1.msra.mxu0 %v198
    %224 = vmatprep.subr.mxu0 0.0
    %225 = vmatpush1.msra.mxu0 %v199
    %226 = vmatprep.subr.mxu0 0.0
    %227 = vmatpush1.msra.mxu0 %v200
    %228 = vmatprep.subr.mxu0 0.0
    %229 = vmatpush1.msra.mxu0 %v201
    %230 = vmatprep.subr.mxu0 0.0
    %231 = vmatpush1.msra.mxu0 %v202
    %232 = vmatprep.subr.mxu0 0.0
    %233 = vmatpush1.msra.mxu0 %v203
    %234 = vmatprep.subr.mxu0 0.0
    %235 = vmatpush1.msra.mxu0 %v204
    %236 = vmatprep.subr.mxu0 0.0
    %237 = vmatpush1.msra.mxu0 %v205
    %238 = vmatprep.subr.mxu0 0.0
    %239 = vmatpush1.msra.mxu0 %v206
    %240 = vmatprep.subr.mxu0 0.0
    %241 = vmatpush1.msra.mxu0 %v207
    %242 = vmatprep.subr.mxu0 0.0
    %243 = vmatpush1.msra.mxu0 0.0
    %244 = vmatprep.subr.mxu0 0.0
    %245 = vmatpush1.msra.mxu0 0.0
    %246 = vmatprep.subr.mxu0 0.0
    %247 = vmatpush1.msra.mxu0 0.0
    %248 = vmatprep.subr.mxu0 0.0
    %249 = vmatpush1.msra.mxu0 0.0
    %250 = vmatprep.subr.mxu0 0.0
    %251 = vmatpush1.msra.mxu0 0.0
    %252 = vmatprep.subr.mxu0 0.0
    %253 = vmatpush1.msra.mxu0 0.0
    %254 = vmatprep.subr.mxu0 0.0
    %255 = vmatpush1.msra.mxu0 0.0
    %256 = vmatprep.subr.mxu0 0.0
    %257 = vmatpush1.msra.mxu0 0.0
    %258 = vmatprep.subr.mxu0 0.0
    %259 = vmatpush1.msra.mxu0 0.0
    %260 = vmatprep.subr.mxu0 0.0
    %261 = vmatpush1.msra.mxu0 0.0
    %262 = vmatprep.subr.mxu0 0.0
    %263 = vmatpush1.msra.mxu0 0.0
    %264 = vmatprep.subr.mxu0 0.0
    %265 = vmatpush1.msra.mxu0 0.0
    %266 = vmatprep.subr.mxu0 0.0
    %267 = vmatpush1.msra.mxu0 0.0
    %268 = vmatprep.subr.mxu0 0.0
    %269 = vmatpush1.msra.mxu0 0.0
    %270 = vmatprep.subr.mxu0 0.0
    %271 = vmatpush1.msra.mxu0 0.0
    %272 = vmatprep.subr.mxu0 0.0
    %273 = vmatpush1.msra.mxu0 0.0
    %274 = vmatprep.mubr.f32.mxu0 0.0
    %275 = vmatmul.mubr.f32.gmra.mrb[0].mxu0 %v208
    %v276 = vpop.f32.mrb[0].mxu0
    %v277 = vadd.f32 0.0, %v276
    %v278 = vpop.f32.mrb[0].mxu0
    %279 = vdwg.mxu0
    %v280 = vadd.f32 %v209, %v277
    %v281 = vtanh.pop %v280
    %282 = vst [vmem:[#allocation6] sm:$0xff] %v281
    %s283 = scalar_lea.vmem [#allocation6], 8
    %v284 = vld [vmem:[%s283] sm:$0xff]
    %285 = vmatprep.subr.mxu0 0.0
    %286 = vmatpush1.msra.mxu0 %v192
    %287 = vmatprep.subr.mxu0 0.0
    %288 = vmatpush1.msra.mxu0 %v193
    %289 = vmatprep.subr.mxu0 0.0
    %290 = vmatpush1.msra.mxu0 %v194
    %291 = vmatprep.subr.mxu0 0.0
    %292 = vmatpush1.msra.mxu0 %v195
    %293 = vmatprep.subr.mxu0 0.0
    %294 = vmatpush1.msra.mxu0 %v196
    %295 = vmatprep.subr.mxu0 0.0
    %296 = vmatpush1.msra.mxu0 %v197
    %297 = vmatprep.subr.mxu0 0.0
    %298 = vmatpush1.msra.mxu0 %v198
    %299 = vmatprep.subr.mxu0 0.0
    %300 = vmatpush1.msra.mxu0 %v199
    %301 = vmatprep.subr.mxu0 0.0
    %302 = vmatpush1.msra.mxu0 %v200
    %303 = vmatprep.subr.mxu0 0.0
    %304 = vmatpush1.msra.mxu0 %v201
    %305 = vmatprep.subr.mxu0 0.0
    %306 = vmatpush1.msra.mxu0 %v202
    %307 = vmatprep.subr.mxu0 0.0
    %308 = vmatpush1.msra.mxu0 %v203
    %309 = vmatprep.subr.mxu0 0.0
    %310 = vmatpush1.msra.mxu0 %v204
    %311 = vmatprep.subr.mxu0 0.0
    %312 = vmatpush1.msra.mxu0 %v205
    %313 = vmatprep.subr.mxu0 0.0
    %314 = vmatpush1.msra.mxu0 %v206
    %315 = vmatprep.subr.mxu0 0.0
    %316 = vmatpush1.msra.mxu0 %v207
    %317 = vmatprep.subr.mxu0 0.0
    %318 = vmatpush1.msra.mxu0 0.0
    %319 = vmatprep.subr.mxu0 0.0
    %320 = vmatpush1.msra.mxu0 0.0
    %321 = vmatprep.subr.mxu0 0.0
    %322 = vmatpush1.msra.mxu0 0.0
    %323 = vmatprep.subr.mxu0 0.0
    %324 = vmatpush1.msra.mxu0 0.0
    %325 = vmatprep.subr.mxu0 0.0
    %326 = vmatpush1.msra.mxu0 0.0
    %327 = vmatprep.subr.mxu0 0.0
    %328 = vmatpush1.msra.mxu0 0.0
    %329 = vmatprep.subr.mxu0 0.0
    %330 = vmatpush1.msra.mxu0 0.0
    %331 = vmatprep.subr.mxu0 0.0
    %332 = vmatpush1.msra.mxu0 0.0
    %333 = vmatprep.subr.mxu0 0.0
    %334 = vmatpush1.msra.mxu0 0.0
    %335 = vmatprep.subr.mxu0 0.0
    %336 = vmatpush1.msra.mxu0 0.0
    %337 = vmatprep.subr.mxu0 0.0
    %338 = vmatpush1.msra.mxu0 0.0
    %339 = vmatprep.subr.mxu0 0.0
    %340 = vmatpush1.msra.mxu0 0.0
    %341 = vmatprep.subr.mxu0 0.0
    %342 = vmatpush1.msra.mxu0 0.0
    %343 = vmatprep.subr.mxu0 0.0
    %344 = vmatpush1.msra.mxu0 0.0
    %345 = vmatprep.subr.mxu0 0.0
    %346 = vmatpush1.msra.mxu0 0.0
    %347 = vmatprep.subr.mxu0 0.0
    %348 = vmatpush1.msra.mxu0 0.0
    %349 = vmatprep.mubr.f32.mxu0 0.0
    %350 = vmatmul.mubr.f32.gmra.mrb[0].mxu0 %v281
    %v351 = vpop.f32.mrb[0].mxu0
    %v352 = vadd.f32 0.0, %v351
    %v353 = vpop.f32.mrb[0].mxu0
    %354 = vdwg.mxu0
    %v355 = vadd.f32 %v284, %v352
    %v356 = vtanh.pop %v355
    %357 = vst [vmem:[%s283] sm:$0xff] %v356
    %s358 = scalar_lea.vmem [#allocation6], 16
    %v359 = vld [vmem:[%s358] sm:$0xff]
    %360 = vmatprep.subr.mxu0 0.0
    %361 = vmatpush1.msra.mxu0 %v192
    %362 = vmatprep.subr.mxu0 0.0
    %363 = vmatpush1.msra.mxu0 %v193
    %364 = vmatprep.subr.mxu0 0.0
    %365 = vmatpush1.msra.mxu0 %v194
    %366 = vmatprep.subr.mxu0 0.0
    %367 = vmatpush1.msra.mxu0 %v195
    %368 = vmatprep.subr.mxu0 0.0
    %369 = vmatpush1.msra.mxu0 %v196
    %370 = vmatprep.subr.mxu0 0.0
    %371 = vmatpush1.msra.mxu0 %v197
    %372 = vmatprep.subr.mxu0 0.0
    %373 = vmatpush1.msra.mxu0 %v198
    %374 = vmatprep.subr.mxu0 0.0
    %375 = vmatpush1.msra.mxu0 %v199
    %376 = vmatprep.subr.mxu0 0.0
    %377 = vmatpush1.msra.mxu0 %v200
    %378 = vmatprep.subr.mxu0 0.0
    %379 = vmatpush1.msra.mxu0 %v201
    %380 = vmatprep.subr.mxu0 0.0
    %381 = vmatpush1.msra.mxu0 %v202
    %382 = vmatprep.subr.mxu0 0.0
    %383 = vmatpush1.msra.mxu0 %v203
    %384 = vmatprep.subr.mxu0 0.0
    %385 = vmatpush1.msra.mxu0 %v204
    %386 = vmatprep.subr.mxu0 0.0
    %387 = vmatpush1.msra.mxu0 %v205
    %388 = vmatprep.subr.mxu0 0.0
    %389 = vmatpush1.msra.mxu0 %v206
    %390 = vmatprep.subr.mxu0 0.0
    %391 = vmatpush1.msra.mxu0 %v207
    %392 = vmatprep.subr.mxu0 0.0
    %393 = vmatpush1.msra.mxu0 0.0
    %394 = vmatprep.subr.mxu0 0.0
    %395 = vmatpush1.msra.mxu0 0.0
    %396 = vmatprep.subr.mxu0 0.0
    %397 = vmatpush1.msra.mxu0 0.0
    %398 = vmatprep.subr.mxu0 0.0
    %399 = vmatpush1.msra.mxu0 0.0
    %400 = vmatprep.subr.mxu0 0.0
    %401 = vmatpush1.msra.mxu0 0.0
    %402 = vmatprep.subr.mxu0 0.0
    %403 = vmatpush1.msra.mxu0 0.0
    %404 = vmatprep.subr.mxu0 0.0
    %405 = vmatpush1.msra.mxu0 0.0
    %406 = vmatprep.subr.mxu0 0.0
    %407 = vmatpush1.msra.mxu0 0.0
    %408 = vmatprep.subr.mxu0 0.0
    %409 = vmatpush1.msra.mxu0 0.0
    %410 = vmatprep.subr.mxu0 0.0
    %411 = vmatpush1.msra.mxu0 0.0
    %412 = vmatprep.subr.mxu0 0.0
    %413 = vmatpush1.msra.mxu0 0.0
    %414 = vmatprep.subr.mxu0 0.0
    %415 = vmatpush1.msra.mxu0 0.0
    %416 = vmatprep.subr.mxu0 0.0
    %417 = vmatpush1.msra.mxu0 0.0
    %418 = vmatprep.subr.mxu0 0.0
    %419 = vmatpush1.msra.mxu0 0.0
    %420 = vmatprep.subr.mxu0 0.0
    %421 = vmatpush1.msra.mxu0 0.0
    %422 = vmatprep.subr.mxu0 0.0
    %423 = vmatpush1.msra.mxu0 0.0
    %424 = vmatprep.mubr.f32.mxu0 0.0
    %425 = vmatmul.mubr.f32.gmra.mrb[0].mxu0 %v356
    %v426 = vpop.f32.mrb[0].mxu0
    %v427 = vadd.f32 0.0, %v426
    %v428 = vpop.f32.mrb[0].mxu0
    %429 = vdwg.mxu0
    %v430 = vadd.f32 %v359, %v427
    %v431 = vtanh.pop %v430
    %432 = vst [vmem:[%s358] sm:$0xff] %v431
    %s433 = scalar_lea.vmem [#allocation6], 24
    %v434 = vld [vmem:[%s433] sm:$0xff]
    %435 = vmatprep.subr.mxu0 0.0
    %436 = vmatpush1.msra.mxu0 %v192
    %437 = vmatprep.subr.mxu0 0.0
    %438 = vmatpush1.msra.mxu0 %v193
    %439 = vmatprep.subr.mxu0 0.0
    %440 = vmatpush1.msra.mxu0 %v194
    %441 = vmatprep.subr.mxu0 0.0
    %442 = vmatpush1.msra.mxu0 %v195
    %443 = vmatprep.subr.mxu0 0.0
    %444 = vmatpush1.msra.mxu0 %v196
    %445 = vmatprep.subr.mxu0 0.0
    %446 = vmatpush1.msra.mxu0 %v197
    %447 = vmatprep.subr.mxu0 0.0
    %448 = vmatpush1.msra.mxu0 %v198
    %449 = vmatprep.subr.mxu0 0.0
    %450 = vmatpush1.msra.mxu0 %v199
    %451 = vmatprep.subr.mxu0 0.0
    %452 = vmatpush1.msra.mxu0 %v200
    %453 = vmatprep.subr.mxu0 0.0
    %454 = vmatpush1.msra.mxu0 %v201
    %455 = vmatprep.subr.mxu0 0.0
    %456 = vmatpush1.msra.mxu0 %v202
    %457 = vmatprep.subr.mxu0 0.0
    %458 = vmatpush1.msra.mxu0 %v203
    %459 = vmatprep.subr.mxu0 0.0
    %460 = vmatpush1.msra.mxu0 %v204
    %461 = vmatprep.subr.mxu0 0.0
    %462 = vmatpush1.msra.mxu0 %v205
    %463 = vmatprep.subr.mxu0 0.0
    %464 = vmatpush1.msra.mxu0 %v206
    %465 = vmatprep.subr.mxu0 0.0
    %466 = vmatpush1.msra.mxu0 %v207
    %467 = vmatprep.subr.mxu0 0.0
    %468 = vmatpush1.msra.mxu0 0.0
    %469 = vmatprep.subr.mxu0 0.0
    %470 = vmatpush1.msra.mxu0 0.0
    %471 = vmatprep.subr.mxu0 0.0
    %472 = vmatpush1.msra.mxu0 0.0
    %473 = vmatprep.subr.mxu0 0.0
    %474 = vmatpush1.msra.mxu0 0.0
    %475 = vmatprep.subr.mxu0 0.0
    %476 = vmatpush1.msra.mxu0 0.0
    %477 = vmatprep.subr.mxu0 0.0
    %478 = vmatpush1.msra.mxu0 0.0
    %479 = vmatprep.subr.mxu0 0.0
    %480 = vmatpush1.msra.mxu0 0.0
    %481 = vmatprep.subr.mxu0 0.0
    %482 = vmatpush1.msra.mxu0 0.0
    %483 = vmatprep.subr.mxu0 0.0
    %484 = vmatpush1.msra.mxu0 0.0
    %485 = vmatprep.subr.mxu0 0.0
    %486 = vmatpush1.msra.mxu0 0.0
    %487 = vmatprep.subr.mxu0 0.0
    %488 = vmatpush1.msra.mxu0 0.0
    %489 = vmatprep.subr.mxu0 0.0
    %490 = vmatpush1.msra.mxu0 0.0
    %491 = vmatprep.subr.mxu0 0.0
    %492 = vmatpush1.msra.mxu0 0.0
    %493 = vmatprep.subr.mxu0 0.0
    %494 = vmatpush1.msra.mxu0 0.0
    %495 = vmatprep.subr.mxu0 0.0
    %496 = vmatpush1.msra.mxu0 0.0
    %497 = vmatprep.subr.mxu0 0.0
    %498 = vmatpush1.msra.mxu0 0.0
    %499 = vmatprep.mubr.f32.mxu0 0.0
    %500 = vmatmul.mubr.f32.gmra.mrb[0].mxu0 %v431
    %v501 = vpop.f32.mrb[0].mxu0
    %v502 = vadd.f32 0.0, %v501
    %v503 = vpop.f32.mrb[0].mxu0
    %504 = vdwg.mxu0
    %v505 = vadd.f32 %v434, %v502
    %v506 = vtanh.pop %v505
    %507 = vst [vmem:[%s433] sm:$0xff] %v506
    %s508 = scalar_lea.vmem [#allocation6], 32
    %v509 = vld [vmem:[%s508] sm:$0xff]
    %510 = vmatprep.subr.mxu0 0.0
    %511 = vmatpush1.msra.mxu0 %v192
    %512 = vmatprep.subr.mxu0 0.0
    %513 = vmatpush1.msra.mxu0 %v193
    %514 = vmatprep.subr.mxu0 0.0
    %515 = vmatpush1.msra.mxu0 %v194
    %516 = vmatprep.subr.mxu0 0.0
    %517 = vmatpush1.msra.mxu0 %v195
    %518 = vmatprep.subr.mxu0 0.0
    %519 = vmatpush1.msra.mxu0 %v196
    %520 = vmatprep.subr.mxu0 0.0
    %521 = vmatpush1.msra.mxu0 %v197
    %522 = vmatprep.subr.mxu0 0.0
    %523 = vmatpush1.msra.mxu0 %v198
    %524 = vmatprep.subr.mxu0 0.0
    %525 = vmatpush1.msra.mxu0 %v199
    %526 = vmatprep.subr.mxu0 0.0
    %527 = vmatpush1.msra.mxu0 %v200
    %528 = vmatprep.subr.mxu0 0.0
    %529 = vmatpush1.msra.mxu0 %v201
    %530 = vmatprep.subr.mxu0 0.0
    %531 = vmatpush1.msra.mxu0 %v202
    %532 = vmatprep.subr.mxu0 0.0
    %533 = vmatpush1.msra.mxu0 %v203
    %534 = vmatprep.subr.mxu0 0.0
    %535 = vmatpush1.msra.mxu0 %v204
    %536 = vmatprep.subr.mxu0 0.0
    %537 = vmatpush1.msra.mxu0 %v205
    %538 = vmatprep.subr.mxu0 0.0
    %539 = vmatpush1.msra.mxu0 %v206
    %540 = vmatprep.subr.mxu0 0.0
    %541 = vmatpush1.msra.mxu0 %v207
    %542 = vmatprep.subr.mxu0 0.0
    %543 = vmatpush1.msra.mxu0 0.0
    %544 = vmatprep.subr.mxu0 0.0
    %545 = vmatpush1.msra.mxu0 0.0
    %546 = vmatprep.subr.mxu0 0.0
    %547 = vmatpush1.msra.mxu0 0.0
    %548 = vmatprep.subr.mxu0 0.0
    %549 = vmatpush1.msra.mxu0 0.0
    %550 = vmatprep.subr.mxu0 0.0
    %551 = vmatpush1.msra.mxu0 0.0
    %552 = vmatprep.subr.mxu0 0.0
    %553 = vmatpush1.msra.mxu0 0.0
    %554 = vmatprep.subr.mxu0 0.0
    %555 = vmatpush1.msra.mxu0 0.0
    %556 = vmatprep.subr.mxu0 0.0
    %557 = vmatpush1.msra.mxu0 0.0
    %558 = vmatprep.subr.mxu0 0.0
    %559 = vmatpush1.msra.mxu0 0.0
    %560 = vmatprep.subr.mxu0 0.0
    %561 = vmatpush1.msra.mxu0 0.0
    %562 = vmatprep.subr.mxu0 0.0
    %563 = vmatpush1.msra.mxu0 0.0
    %564 = vmatprep.subr.mxu0 0.0
    %565 = vmatpush1.msra.mxu0 0.0
    %566 = vmatprep.subr.mxu0 0.0
    %567 = vmatpush1.msra.mxu0 0.0
    %568 = vmatprep.subr.mxu0 0.0
    %569 = vmatpush1.msra.mxu0 0.0
    %570 = vmatprep.subr.mxu0 0.0
    %571 = vmatpush1.msra.mxu0 0.0
    %572 = vmatprep.subr.mxu0 0.0
    %573 = vmatpush1.msra.mxu0 0.0
    %574 = vmatprep.mubr.f32.mxu0 0.0
    %575 = vmatmul.mubr.f32.gmra.mrb[0].mxu0 %v506
    %v576 = vpop.f32.mrb[0].mxu0
    %v577 = vadd.f32 0.0, %v576
    %v578 = vpop.f32.mrb[0].mxu0
    %579 = vdwg.mxu0
    %v580 = vadd.f32 %v509, %v577
    %v581 = vtanh.pop %v580
    %582 = vst [vmem:[%s508] sm:$0xff] %v581
    %s583 = scalar_lea.vmem [#allocation6], 40
    %v584 = vld [vmem:[%s583] sm:$0xff]
    %585 = vmatprep.subr.mxu0 0.0
    %586 = vmatpush1.msra.mxu0 %v192
    %587 = vmatprep.subr.mxu0 0.0
    %588 = vmatpush1.msra.mxu0 %v193
    %589 = vmatprep.subr.mxu0 0.0
    %590 = vmatpush1.msra.mxu0 %v194
    %591 = vmatprep.subr.mxu0 0.0
    %592 = vmatpush1.msra.mxu0 %v195
    %593 = vmatprep.subr.mxu0 0.0
    %594 = vmatpush1.msra.mxu0 %v196
    %595 = vmatprep.subr.mxu0 0.0
    %596 = vmatpush1.msra.mxu0 %v197
    %597 = vmatprep.subr.mxu0 0.0
    %598 = vmatpush1.msra.mxu0 %v198
    %599 = vmatprep.subr.mxu0 0.0
    %600 = vmatpush1.msra.mxu0 %v199
    %601 = vmatprep.subr.mxu0 0.0
    %602 = vmatpush1.msra.mxu0 %v200
    %603 = vmatprep.subr.mxu0 0.0
    %604 = vmatpush1.msra.mxu0 %v201
    %605 = vmatprep.subr.mxu0 0.0
    %606 = vmatpush1.msra.mxu0 %v202
    %607 = vmatprep.subr.mxu0 0.0
    %608 = vmatpush1.msra.mxu0 %v203
    %609 = vmatprep.subr.mxu0 0.0
    %610 = vmatpush1.msra.mxu0 %v204
    %611 = vmatprep.subr.mxu0 0.0
    %612 = vmatpush1.msra.mxu0 %v205
    %613 = vmatprep.subr.mxu0 0.0
    %614 = vmatpush1.msra.mxu0 %v206
    %615 = vmatprep.subr.mxu0 0.0
    %616 = vmatpush1.msra.mxu0 %v207
    %617 = vmatprep.subr.mxu0 0.0
    %618 = vmatpush1.msra.mxu0 0.0
    %619 = vmatprep.subr.mxu0 0.0
    %620 = vmatpush1.msra.mxu0 0.0
    %621 = vmatprep.subr.mxu0 0.0
    %622 = vmatpush1.msra.mxu0 0.0
    %623 = vmatprep.subr.mxu0 0.0
    %624 = vmatpush1.msra.mxu0 0.0
    %625 = vmatprep.subr.mxu0 0.0
    %626 = vmatpush1.msra.mxu0 0.0
    %627 = vmatprep.subr.mxu0 0.0
    %628 = vmatpush1.msra.mxu0 0.0
    %629 = vmatprep.subr.mxu0 0.0
    %630 = vmatpush1.msra.mxu0 0.0
    %631 = vmatprep.subr.mxu0 0.0
    %632 = vmatpush1.msra.mxu0 0.0
    %633 = vmatprep.subr.mxu0 0.0
    %634 = vmatpush1.msra.mxu0 0.0
    %635 = vmatprep.subr.mxu0 0.0
    %636 = vmatpush1.msra.mxu0 0.0
    %637 = vmatprep.subr.mxu0 0.0
    %638 = vmatpush1.msra.mxu0 0.0
    %639 = vmatprep.subr.mxu0 0.0
    %640 = vmatpush1.msra.mxu0 0.0
    %641 = vmatprep.subr.mxu0 0.0
    %642 = vmatpush1.msra.mxu0 0.0
    %643 = vmatprep.subr.mxu0 0.0
    %644 = vmatpush1.msra.mxu0 0.0
    %645 = vmatprep.subr.mxu0 0.0
    %646 = vmatpush1.msra.mxu0 0.0
    %647 = vmatprep.subr.mxu0 0.0
    %648 = vmatpush1.msra.mxu0 0.0
    %649 = vmatprep.mubr.f32.mxu0 0.0
    %650 = vmatmul.mubr.f32.gmra.mrb[0].mxu0 %v581
    %v651 = vpop.f32.mrb[0].mxu0
    %v652 = vadd.f32 0.0, %v651
    %v653 = vpop.f32.mrb[0].mxu0
    %654 = vdwg.mxu0
    %v655 = vadd.f32 %v584, %v652
    %v656 = vtanh.pop %v655
    %657 = vst [vmem:[%s583] sm:$0xff] %v656
    %s658 = scalar_lea.vmem [#allocation6], 48
    %v659 = vld [vmem:[%s658] sm:$0xff]
    %660 = vmatprep.subr.mxu0 0.0
    %661 = vmatpush1.msra.mxu0 %v192
    %662 = vmatprep.subr.mxu0 0.0
    %663 = vmatpush1.msra.mxu0 %v193
    %664 = vmatprep.subr.mxu0 0.0
    %665 = vmatpush1.msra.mxu0 %v194
    %666 = vmatprep.subr.mxu0 0.0
    %667 = vmatpush1.msra.mxu0 %v195
    %668 = vmatprep.subr.mxu0 0.0
    %669 = vmatpush1.msra.mxu0 %v196
    %670 = vmatprep.subr.mxu0 0.0
    %671 = vmatpush1.msra.mxu0 %v197
    %672 = vmatprep.subr.mxu0 0.0
    %673 = vmatpush1.msra.mxu0 %v198
    %674 = vmatprep.subr.mxu0 0.0
    %675 = vmatpush1.msra.mxu0 %v199
    %676 = vmatprep.subr.mxu0 0.0
    %677 = vmatpush1.msra.mxu0 %v200
    %678 = vmatprep.subr.mxu0 0.0
    %679 = vmatpush1.msra.mxu0 %v201
    %680 = vmatprep.subr.mxu0 0.0
    %681 = vmatpush1.msra.mxu0 %v202
    %682 = vmatprep.subr.mxu0 0.0
    %683 = vmatpush1.msra.mxu0 %v203
    %684 = vmatprep.subr.mxu0 0.0
    %685 = vmatpush1.msra.mxu0 %v204
    %686 = vmatprep.subr.mxu0 0.0
    %687 = vmatpush1.msra.mxu0 %v205
    %688 = vmatprep.subr.mxu0 0.0
    %689 = vmatpush1.msra.mxu0 %v206
    %690 = vmatprep.subr.mxu0 0.0
    %691 = vmatpush1.msra.mxu0 %v207
    %692 = vmatprep.subr.mxu0 0.0
    %693 = vmatpush1.msra.mxu0 0.0
    %694 = vmatprep.subr.mxu0 0.0
    %695 = vmatpush1.msra.mxu0 0.0
    %696 = vmatprep.subr.mxu0 0.0
    %697 = vmatpush1.msra.mxu0 0.0
    %698 = vmatprep.subr.mxu0 0.0
    %699 = vmatpush1.msra.mxu0 0.0
    %700 = vmatprep.subr.mxu0 0.0
    %701 = vmatpush1.msra.mxu0 0.0
    %702 = vmatprep.subr.mxu0 0.0
    %703 = vmatpush1.msra.mxu0 0.0
    %704 = vmatprep.subr.mxu0 0.0
    %705 = vmatpush1.msra.mxu0 0.0
    %706 = vmatprep.subr.mxu0 0.0
    %707 = vmatpush1.msra.mxu0 0.0
    %708 = vmatprep.subr.mxu0 0.0
    %709 = vmatpush1.msra.mxu0 0.0
    %710 = vmatprep.subr.mxu0 0.0
    %711 = vmatpush1.msra.mxu0 0.0
    %712 = vmatprep.subr.mxu0 0.0
    %713 = vmatpush1.msra.mxu0 0.0
    %714 = vmatprep.subr.mxu0 0.0
    %715 = vmatpush1.msra.mxu0 0.0
    %716 = vmatprep.subr.mxu0 0.0
    %717 = vmatpush1.msra.mxu0 0.0
    %718 = vmatprep.subr.mxu0 0.0
    %719 = vmatpush1.msra.mxu0 0.0
    %720 = vmatprep.subr.mxu0 0.0
    %721 = vmatpush1.msra.mxu0 0.0
    %722 = vmatprep.subr.mxu0 0.0
    %723 = vmatpush1.msra.mxu0 0.0
    %724 = vmatprep.mubr.f32.mxu0 0.0
    %725 = vmatmul.mubr.f32.gmra.mrb[0].mxu0 %v656
    %v726 = vpop.f32.mrb[0].mxu0
    %v727 = vadd.f32 0.0, %v726
    %v728 = vpop.f32.mrb[0].mxu0
    %729 = vdwg.mxu0
    %v730 = vadd.f32 %v659, %v727
    %v731 = vtanh.pop %v730
    %732 = vst [vmem:[%s658] sm:$0xff] %v731
    %s733 = scalar_lea.vmem [#allocation6], 56
    %v734 = vld [vmem:[%s733] sm:$0xff]
    %735 = vmatprep.subr.mxu0 0.0
    %736 = vmatpush1.msra.mxu0 %v192
    %737 = vmatprep.subr.mxu0 0.0
    %738 = vmatpush1.msra.mxu0 %v193
    %739 = vmatprep.subr.mxu0 0.0
    %740 = vmatpush1.msra.mxu0 %v194
    %741 = vmatprep.subr.mxu0 0.0
    %742 = vmatpush1.msra.mxu0 %v195
    %743 = vmatprep.subr.mxu0 0.0
    %744 = vmatpush1.msra.mxu0 %v196
    %745 = vmatprep.subr.mxu0 0.0
    %746 = vmatpush1.msra.mxu0 %v197
    %747 = vmatprep.subr.mxu0 0.0
    %748 = vmatpush1.msra.mxu0 %v198
    %749 = vmatprep.subr.mxu0 0.0
    %750 = vmatpush1.msra.mxu0 %v199
    %751 = vmatprep.subr.mxu0 0.0
    %752 = vmatpush1.msra.mxu0 %v200
    %753 = vmatprep.subr.mxu0 0.0
    %754 = vmatpush1.msra.mxu0 %v201
    %755 = vmatprep.subr.mxu0 0.0
    %756 = vmatpush1.msra.mxu0 %v202
    %757 = vmatprep.subr.mxu0 0.0
    %758 = vmatpush1.msra.mxu0 %v203
    %759 = vmatprep.subr.mxu0 0.0
    %760 = vmatpush1.msra.mxu0 %v204
    %761 = vmatprep.subr.mxu0 0.0
    %762 = vmatpush1.msra.mxu0 %v205
    %763 = vmatprep.subr.mxu0 0.0
    %764 = vmatpush1.msra.mxu0 %v206
    %765 = vmatprep.subr.mxu0 0.0
    %766 = vmatpush1.msra.mxu0 %v207
    %767 = vmatprep.subr.mxu0 0.0
    %768 = vmatpush1.msra.mxu0 0.0
    %769 = vmatprep.subr.mxu0 0.0
    %770 = vmatpush1.msra.mxu0 0.0
    %771 = vmatprep.subr.mxu0 0.0
    %772 = vmatpush1.msra.mxu0 0.0
    %773 = vmatprep.subr.mxu0 0.0
    %774 = vmatpush1.msra.mxu0 0.0
    %775 = vmatprep.subr.mxu0 0.0
    %776 = vmatpush1.msra.mxu0 0.0
    %777 = vmatprep.subr.mxu0 0.0
    %778 = vmatpush1.msra.mxu0 0.0
    %779 = vmatprep.subr.mxu0 0.0
    %780 = vmatpush1.msra.mxu0 0.0
    %781 = vmatprep.subr.mxu0 0.0
    %782 = vmatpush1.msra.mxu0 0.0
    %783 = vmatprep.subr.mxu0 0.0
    %784 = vmatpush1.msra.mxu0 0.0
    %785 = vmatprep.subr.mxu0 0.0
    %786 = vmatpush1.msra.mxu0 0.0
    %787 = vmatprep.subr.mxu0 0.0
    %788 = vmatpush1.msra.mxu0 0.0
    %789 = vmatprep.subr.mxu0 0.0
    %790 = vmatpush1.msra.mxu0 0.0
    %791 = vmatprep.subr.mxu0 0.0
    %792 = vmatpush1.msra.mxu0 0.0
    %793 = vmatprep.subr.mxu0 0.0
    %794 = vmatpush1.msra.mxu0 0.0
    %795 = vmatprep.subr.mxu0 0.0
    %796 = vmatpush1.msra.mxu0 0.0
    %797 = vmatprep.subr.mxu0 0.0
    %798 = vmatpush1.msra.mxu0 0.0
    %799 = vmatprep.mubr.f32.mxu0 0.0
    %800 = vmatmul.mubr.f32.gmra.mrb[0].mxu0 %v731
    %v801 = vpop.f32.mrb[0].mxu0
    %v802 = vadd.f32 0.0, %v801
    %v803 = vpop.f32.mrb[0].mxu0
    %804 = vdwg.mxu0
    %v805 = vadd.f32 %v734, %v802
    %v806 = vtanh.pop %v805
    %807 = vst [vmem:[%s733] sm:$0xff] %v806
    %808 = vst [vmem:[#allocation2] sm:$0xff] %v806
    // Predicated region
    $region26: #{tpu_custom_call.1} parent=1 // pred_check
      _
    $region27: #{tpu_custom_call.1} parent=1 // pred_check_branch
      %810 = sbr.rel (0) target = $region29
    $region28: #{tpu_custom_call.1} parent=1 // pred_region
      %s812 = ssub.s32 1024, 1024
      %813 = vsyncadd [#allocation5], %s812
      %s814 = sshll.u32 [#allocation6], 4
      %s815 = int_to_ptr.vmem [resolvable:$true] %s814
      %820 = dma.vmem_to_hbm [thread:$0]  %s815, 1024, %s4, [#allocation5], 128, 128, 8
    $region29: #{tpu_custom_call.1} parent=1 // pred_fallthru
      _
    // Predicated region
    $region30: #{tpu_custom_call.1} parent=1 // pred_check
      _
    $region31: #{tpu_custom_call.1} parent=1 // pred_check_branch
      %822 = sbr.rel (0) target = $region33
    $region32: #{tpu_custom_call.1} parent=1 // pred_region
      %823 = dma.done [#allocation5], 1024
    $region33: #{tpu_custom_call.1} parent=1 // pred_fallthru
      _
    %824 = vsyncpa [#allocation4], 1
    %825 = vsyncpa [#allocation5], 1

</llo_original>
